<compile_context>
chip_gen: v5e
topology: v5e:2x2
jax: 0.10.0
libtpu: 0.0.40
codegen_flags: <defaults>
</compile_context>

<pallas_src>
import functools

import jax
import jax.numpy as jnp
import numpy as np
from jax.experimental import pallas as pl
from jax.experimental.pallas import tpu as pltpu

BN_EPS = 1e-5
HIDDEN = 64


def _round_up(x, m):
    return ((x + m - 1) // m) * m


# --------------------------------------------------------------------------
# Fused single-block kernel (small batches: everything fits in VMEM easily).
# --------------------------------------------------------------------------
def _fused_kernel(
    x_ref, w1_ref, g1_ref, be1_ref, w2_ref, g2_ref, be2_ref, w3_ref, b3_ref,
    o_ref, *, valid_rows,
):
    inv_n = 1.0 / float(valid_rows)

    # fc1 on bf16 operands, f32 accumulation.  fc bias b1 omitted: train-mode
    # BN subtracts the per-column batch mean, cancelling it exactly.
    h = jnp.dot(x_ref[...], w1_ref[...], preferred_element_type=jnp.float32)

    # Single-pass batch stats (padded rows of x are zero -> h rows are exactly
    # zero -> they do not perturb sum / sumsq; divide by the true batch size).
    s = jnp.sum(h, axis=0, keepdims=True)
    s2 = jnp.sum(h * h, axis=0, keepdims=True)
    mean = s * inv_n
    var = jnp.maximum(s2 * inv_n - mean * mean, 0.0)
    scale = g1_ref[...] * jax.lax.rsqrt(var + BN_EPS)
    shift = be1_ref[...] - mean * scale
    a = jnp.maximum(h * scale + shift, 0.0)

    # Zero the padded rows so bn2's batch stats only see real rows.
    valid = (
        jax.lax.broadcasted_iota(jnp.int32, (a.shape[0], 1), 0) < valid_rows
    )
    a = jnp.where(valid, a, 0.0)

    # fc2 + bn2 (same fusion) + relu.
    h = jnp.dot(a, w2_ref[...], preferred_element_type=jnp.float32)
    s = jnp.sum(h, axis=0, keepdims=True)
    s2 = jnp.sum(h * h, axis=0, keepdims=True)
    mean = s * inv_n
    var = jnp.maximum(s2 * inv_n - mean * mean, 0.0)
    scale = g2_ref[...] * jax.lax.rsqrt(var + BN_EPS)
    shift = be2_ref[...] - mean * scale
    a = jnp.maximum(h * scale + shift, 0.0)

    # fc3 into a lane-dense (B_pad, 128) tile (extra columns are zero weights).
    o_ref[...] = (
        jnp.dot(a, w3_ref[...], preferred_element_type=jnp.float32) + b3_ref[...]
    )


# --------------------------------------------------------------------------
# Batch-tiled 3-pass pipeline (large batches).
# --------------------------------------------------------------------------
def _fc1_stats_kernel(x_ref, w1_ref, h1_ref, ssq_ref):
    h = jnp.dot(x_ref[...], w1_ref[...], preferred_element_type=jnp.float32)
    h1_ref[...] = h
    s = jnp.sum(h, axis=0, keepdims=True)
    s2 = jnp.sum(h * h, axis=0, keepdims=True)
    ssq_ref[...] = jnp.concatenate([s, s2], axis=0).reshape(1, 2, h.shape[1])


def _bn1_fc2_stats_kernel(
    h1_ref, sc_ref, sh_ref, w2_ref, h2_ref, ssq_ref, *, tm, valid_rows
):
    a = jnp.maximum(h1_ref[...] * sc_ref[...] + sh_ref[...], 0.0)
    # Mask padded batch rows so they contribute zero to the bn2 statistics.
    row0 = pl.program_id(0) * tm
    valid = (
        row0 + jax.lax.broadcasted_iota(jnp.int32, (tm, 1), 0) < valid_rows
    )
    a = jnp.where(valid, a, 0.0)
    h = jnp.dot(a, w2_ref[...], preferred_element_type=jnp.float32)
    h2_ref[...] = h
    s = jnp.sum(h, axis=0, keepdims=True)
    s2 = jnp.sum(h * h, axis=0, keepdims=True)
    ssq_ref[...] = jnp.concatenate([s, s2], axis=0).reshape(1, 2, h.shape[1])


def _bn2_fc3_kernel(h2_ref, sc_ref, sh_ref, w3_ref, b3_ref, o_ref):
    a = jnp.maximum(h2_ref[...] * sc_ref[...] + sh_ref[...], 0.0)
    o_ref[...] = (
        jnp.dot(a, w3_ref[...], preferred_element_type=jnp.float32) + b3_ref[...]
    )


def _bn_scale_shift(sums, gamma, beta, n):
    """sums: (2, H) [sum; sum of squares] -> per-column (scale, shift)."""
    mean = sums[0:1, :] / n
    var = jnp.maximum(sums[1:2, :] / n - mean * mean, 0.0)
    scale = gamma.reshape(1, -1) * jax.lax.rsqrt(var + BN_EPS)
    shift = beta.reshape(1, -1) - mean * scale
    return scale, shift


# --------------------------------------------------------------------------
# Wrapper
# --------------------------------------------------------------------------
def discriminator_forward(feature, alpha, params, *, tm=512):
    """Forward pass. `alpha` only affects the (not implemented) backward pass."""
    del alpha  # ReverseLayerF forward == identity.
    assert tm % 8 == 0
    B, F = feature.shape
    H = params["w1"].shape[1]
    n_out = params["w3"].shape[1]

    # --- wrapper-side layout prep -----------------------------------------
    F_pad = _round_up(F, 128)
    x = feature.astype(jnp.float32)
    w1 = params["w1"]
    if F_pad != F:
        x = jnp.pad(x, ((0, 0), (0, F_pad - F)))
        w1 = jnp.pad(w1, ((0, F_pad - F), (0, 0)))
    x = x.astype(jnp.bfloat16)          # halve fc1 input DMA, bf16 MXU path
    w1 = w1.astype(jnp.bfloat16)

    out_pad = _round_up(n_out, 128)     # lane-dense output store
    w3 = jnp.pad(params["w3"], ((0, 0), (0, out_pad - n_out)))
    b3 = jnp.pad(params["b3"].reshape(1, -1), ((0, 0), (0, out_pad - n_out)))

    g1 = params["g1"].reshape(1, H)
    be1 = params["be1"].reshape(1, H)
    g2 = params["g2"].reshape(1, H)
    be2 = params["be2"].reshape(1, H)
    w2 = params["w2"]
    # NOTE: b1/b2 are intentionally unused: train-mode BN cancels them exactly.

    vmem = pl.BlockSpec(memory_space=pltpu.MemorySpace.VMEM)

    # --- small batch: single fused grid-less kernel ------------------------
    if B <= tm:
        B_pad = _round_up(B, 8)
        if B_pad != B:
            x = jnp.pad(x, ((0, B_pad - B), (0, 0)))
        out = pl.pallas_call(
            functools.partial(_fused_kernel, valid_rows=B),
            out_shape=jax.ShapeDtypeStruct((B_pad, out_pad), jnp.float32),
            in_specs=[vmem] * 9,
            out_specs=vmem,
        )(x, w1, g1, be1, w2, g2, be2, w3, b3)
        return out[:B, :n_out]

    # --- large batch: 3-pass batch-tiled pipeline --------------------------
    n_tiles = pl.cdiv(B, tm)
    B_pad = n_tiles * tm
    if B_pad != B:
        x = jnp.pad(x, ((0, B_pad - B), (0, 0)))

    par = pltpu.CompilerParams(dimension_semantics=("parallel",))
    par_big = pltpu.CompilerParams(
        dimension_semantics=("parallel",), vmem_limit_bytes=64 * 1024 * 1024
    )

    # Pass 1: h1 = x @ w1 (bf16 MXU), per-tile partial sum / sumsq of h1.
    h1, part1 = pl.pallas_call(
        _fc1_stats_kernel,
        grid=(n_tiles,),
        in_specs=[
            pl.BlockSpec((tm, F_pad), lambda i: (i, 0)),
            pl.BlockSpec((F_pad, H), lambda i: (0, 0)),
        ],
        out_specs=[
            pl.BlockSpec((tm, H), lambda i: (i, 0)),
            pl.BlockSpec((1, 2, H), lambda i: (i, 0, 0)),
        ],
        out_shape=(
            jax.ShapeDtypeStruct((B_pad, H), jnp.float32),
            jax.ShapeDtypeStruct((n_tiles, 2, H), jnp.float32),
        ),
        compiler_params=par_big,
    )(x, w1)
    scale1, shift1 = _bn_scale_shift(jnp.sum(part1, axis=0), g1, be1, B)

    # Pass 2: a1 = relu(bn1(h1)); h2 = a1 @ w2; partial sum / sumsq of h2.
    h2, part2 = pl.pallas_call(
        functools.partial(_bn1_fc2_stats_kernel, tm=tm, valid_rows=B),
        grid=(n_tiles,),
        in_specs=[
            pl.BlockSpec((tm, H), lambda i: (i, 0)),
            pl.BlockSpec((1, H), lambda i: (0, 0)),
            pl.BlockSpec((1, H), lambda i: (0, 0)),
            pl.BlockSpec((H, H), lambda i: (0, 0)),
        ],
        out_specs=[
            pl.BlockSpec((tm, H), lambda i: (i, 0)),
            pl.BlockSpec((1, 2, H), lambda i: (i, 0, 0)),
        ],
        out_shape=(
            jax.ShapeDtypeStruct((B_pad, H), jnp.float32),
            jax.ShapeDtypeStruct((n_tiles, 2, H), jnp.float32),
        ),
        compiler_params=par,
    )(h1, scale1, shift1, w2)
    scale2, shift2 = _bn_scale_shift(jnp.sum(part2, axis=0), g2, be2, B)

    # Pass 3: logits = relu(bn2(h2)) @ w3_pad + b3_pad  (lane-dense 128-wide).
    out = pl.pallas_call(
        _bn2_fc3_kernel,
        grid=(n_tiles,),
        in_specs=[
            pl.BlockSpec((tm, H), lambda i: (i, 0)),
            pl.BlockSpec((1, H), lambda i: (0, 0)),
            pl.BlockSpec((1, H), lambda i: (0, 0)),
            pl.BlockSpec((H, out_pad), lambda i: (0, 0)),
            pl.BlockSpec((1, out_pad), lambda i: (0, 0)),
        ],
        out_specs=pl.BlockSpec((tm, out_pad), lambda i: (i, 0)),
        out_shape=jax.ShapeDtypeStruct((B_pad, out_pad), jnp.float32),
        compiler_params=par,
    )(h2, scale2, shift2, w3, b3)

    return out[:B, :n_out]


# --------------------------------------------------------------------------
# Parameter init (mirrors Discriminator._init_weights) and a JAX reference.
# --------------------------------------------------------------------------
def xavier_uniform(key, fan_in, fan_out):
    limit = float(np.sqrt(6.0 / (fan_in + fan_out)))
    return jax.random.uniform(
        key, (fan_in, fan_out), jnp.float32, minval=-limit, maxval=limit
    )


def init_params(key, num_shared_feature, n1=64, n2=64, n_out=2):
    ks = jax.random.split(key, 6)
    return {
        "w1": xavier_uniform(ks[0], num_shared_feature, n1),
        "b1": jax.random.normal(ks[1], (1, n1), jnp.float32) * 1e-6,
        "g1": jnp.ones((1, n1), jnp.float32),
        "be1": jnp.zeros((1, n1), jnp.float32),
        "w2": xavier_uniform(ks[2], n1, n2),
        "b2": jax.random.normal(ks[3], (1, n2), jnp.float32) * 1e-6,
        "g2": jnp.ones((1, n2), jnp.float32),
        "be2": jnp.zeros((1, n2), jnp.float32),
        "w3": xavier_uniform(ks[4], n2, n_out),
        "b3": jax.random.normal(ks[5], (1, n_out), jnp.float32) * 1e-6,
    }


def reference_forward(feature, params):
    """Faithful (train-mode BN) reference; fc1 uses the same bf16-rounded
    operands as the kernel so the check validates the kernel, not the
    intentional bf16 quantization of the input DMA."""

    def bn(h, g, be):
        mean = jnp.mean(h, axis=0, keepdims=True)
        var = jnp.mean((h - mean) ** 2, axis=0, keepdims=True)
        return (h - mean) * jax.lax.rsqrt(var + BN_EPS) * g + be

    x = feature.astype(jnp.bfloat16)
    w1 = params["w1"].astype(jnp.bfloat16)
    h = jnp.dot(x, w1, preferred_element_type=jnp.float32) + params["b1"]
    h = jnp.maximum(bn(h, params["g1"], params["be1"]), 0.0)
    h = h @ params["w2"] + params["b2"]
    h = jnp.maximum(bn(h, params["g2"], params["be2"]), 0.0)
    return h @ params["w3"] + params["b3"]


if __name__ == "__main__":
    key = jax.random.PRNGKey(0)
    k1, k2, kp = jax.random.split(key, 3)
    F = 96  # num_shared_feature (not a multiple of 128 -> exercises F padding)
    params = init_params(kp, F)
    alpha = jnp.float32(0.5)

    # Case 1: small batch -> fused grid-less kernel (with batch-row padding).
    x_small = jax.random.normal(k1, (10, F), jnp.float32)
    out_small = jax.block_until_ready(discriminator_forward(x_small, alpha, params))
    ref_small = reference_forward(x_small, params)
    assert out_small.shape == (10, 2)
    np.testing.assert_allclose(
        np.asarray(out_small), np.asarray(ref_small), rtol=1e-3, atol=1e-3
    )

    # Case 2: larger batch -> batch-tiled 3-pass pipeline (2 tiles, row mask).
    x_big = jax.random.normal(k2, (250, F), jnp.float32)
    out_big = jax.block_until_ready(
        discriminator_forward(x_big, alpha, params, tm=128)
    )
    ref_big = reference_forward(x_big, params)
    assert out_big.shape == (250, 2)
    np.testing.assert_allclose(
        np.asarray(out_big), np.asarray(ref_big), rtol=1e-3, atol=1e-3
    )

    print("KERNEL_OK")
</pallas_src>

<mosaic_0001>
module attributes {stable_mosaic.version = 11 : i64} {
  func.func @_fused_kernel(%arg0: memref<16x128xbf16, #tpu.memory_space<vmem>>, %arg1: memref<128x64xbf16, #tpu.memory_space<vmem>>, %arg2: memref<1x64xf32, #tpu.memory_space<vmem>>, %arg3: memref<1x64xf32, #tpu.memory_space<vmem>>, %arg4: memref<64x64xf32, #tpu.memory_space<vmem>>, %arg5: memref<1x64xf32, #tpu.memory_space<vmem>>, %arg6: memref<1x64xf32, #tpu.memory_space<vmem>>, %arg7: memref<64x128xf32, #tpu.memory_space<vmem>>, %arg8: memref<1x128xf32, #tpu.memory_space<vmem>>, %arg9: memref<16x128xf32, #tpu.memory_space<vmem>>) attributes {dimension_semantics = [], scalar_prefetch = 0 : i64, scratch_operands = 0 : i64, tpu.core_type = #tpu.core_type<tc>} {
    %c0 = arith.constant 0 : index
    %c0_0 = arith.constant 0 : index
    %0 = vector.load %arg0[%c0, %c0_0] : memref<16x128xbf16, #tpu.memory_space<vmem>>, vector<16x128xbf16>
    %c0_1 = arith.constant 0 : index
    %c0_2 = arith.constant 0 : index
    %1 = vector.load %arg1[%c0_1, %c0_2] : memref<128x64xbf16, #tpu.memory_space<vmem>>, vector<128x64xbf16>
    %cst = arith.constant dense<0.000000e+00> : vector<16x64xf32>
    %2 = tpu.matmul %0, %1, %cst {dimension_numbers = #tpu.dot_dimension_numbers<[1], [0], [0], [1], [0, 0, 1, 1], [], []>} : vector<16x128xbf16>, vector<128x64xbf16>, vector<16x64xf32> -> vector<16x64xf32>
    %cst_3 = arith.constant dense<0.000000e+00> : vector<64xf32>
    %3 = vector.multi_reduction <add>, %2, %cst_3 [0] : vector<16x64xf32> to vector<64xf32>
    %4 = vector.shape_cast %3 : vector<64xf32> to vector<1x64xf32>
    %5 = arith.mulf %2, %2 : vector<16x64xf32>
    %cst_4 = arith.constant dense<0.000000e+00> : vector<64xf32>
    %6 = vector.multi_reduction <add>, %5, %cst_4 [0] : vector<16x64xf32> to vector<64xf32>
    %7 = vector.shape_cast %6 : vector<64xf32> to vector<1x64xf32>
    %cst_5 = arith.constant 1.000000e-01 : f32
    %8 = vector.broadcast %cst_5 : f32 to vector<1x64xf32>
    %9 = arith.mulf %4, %8 : vector<1x64xf32>
    %cst_6 = arith.constant 1.000000e-01 : f32
    %10 = vector.broadcast %cst_6 : f32 to vector<1x64xf32>
    %11 = arith.mulf %7, %10 : vector<1x64xf32>
    %12 = arith.mulf %9, %9 : vector<1x64xf32>
    %13 = arith.subf %11, %12 : vector<1x64xf32>
    %cst_7 = arith.constant 0.000000e+00 : f32
    %14 = vector.broadcast %cst_7 : f32 to vector<1x64xf32>
    %15 = arith.maximumf %13, %14 : vector<1x64xf32>
    %c0_8 = arith.constant 0 : index
    %c0_9 = arith.constant 0 : index
    %16 = vector.load %arg2[%c0_8, %c0_9] : memref<1x64xf32, #tpu.memory_space<vmem>>, vector<1x64xf32>
    %cst_10 = arith.constant 9.99999974E-6 : f32
    %17 = vector.broadcast %cst_10 : f32 to vector<1x64xf32>
    %18 = arith.addf %15, %17 : vector<1x64xf32>
    %19 = math.rsqrt %18 : vector<1x64xf32>
    %20 = arith.mulf %16, %19 : vector<1x64xf32>
    %c0_11 = arith.constant 0 : index
    %c0_12 = arith.constant 0 : index
    %21 = vector.load %arg3[%c0_11, %c0_12] : memref<1x64xf32, #tpu.memory_space<vmem>>, vector<1x64xf32>
    %22 = arith.mulf %9, %20 : vector<1x64xf32>
    %23 = arith.subf %21, %22 : vector<1x64xf32>
    %24 = vector.broadcast %20 : vector<1x64xf32> to vector<16x64xf32>
    %25 = arith.mulf %2, %24 : vector<16x64xf32>
    %26 = vector.broadcast %23 : vector<1x64xf32> to vector<16x64xf32>
    %27 = arith.addf %25, %26 : vector<16x64xf32>
    %cst_13 = arith.constant 0.000000e+00 : f32
    %28 = vector.broadcast %cst_13 : f32 to vector<16x64xf32>
    %29 = arith.maximumf %27, %28 : vector<16x64xf32>
    %30 = tpu.iota {dimensions = array<i32: 0>} : vector<16x1xi32>
    %c10_i32 = arith.constant 10 : i32
    %31 = vector.broadcast %c10_i32 : i32 to vector<16x1xi32>
    %32 = arith.cmpi slt, %30, %31 : vector<16x1xi32>
    %cst_14 = arith.constant 0.000000e+00 : f32
    %33 = vector.shape_cast %32 : vector<16x1xi1> to vector<16x1xi1>
    %34 = vector.broadcast %33 : vector<16x1xi1> to vector<16x64xi1>
    %35 = vector.broadcast %cst_14 : f32 to vector<16x64xf32>
    %36 = arith.select %34, %29, %35 : vector<16x64xi1>, vector<16x64xf32>
    %c0_15 = arith.constant 0 : index
    %c0_16 = arith.constant 0 : index
    %37 = vector.load %arg4[%c0_15, %c0_16] : memref<64x64xf32, #tpu.memory_space<vmem>>, vector<64x64xf32>
    %cst_17 = arith.constant dense<0.000000e+00> : vector<16x64xf32>
    %38 = tpu.matmul %36, %37, %cst_17 {dimension_numbers = #tpu.dot_dimension_numbers<[1], [0], [0], [1], [0, 0, 1, 1], [], []>} : vector<16x64xf32>, vector<64x64xf32>, vector<16x64xf32> -> vector<16x64xf32>
    %cst_18 = arith.constant dense<0.000000e+00> : vector<64xf32>
    %39 = vector.multi_reduction <add>, %38, %cst_18 [0] : vector<16x64xf32> to vector<64xf32>
    %40 = vector.shape_cast %39 : vector<64xf32> to vector<1x64xf32>
    %41 = arith.mulf %38, %38 : vector<16x64xf32>
    %cst_19 = arith.constant dense<0.000000e+00> : vector<64xf32>
    %42 = vector.multi_reduction <add>, %41, %cst_19 [0] : vector<16x64xf32> to vector<64xf32>
    %43 = vector.shape_cast %42 : vector<64xf32> to vector<1x64xf32>
    %cst_20 = arith.constant 1.000000e-01 : f32
    %44 = vector.broadcast %cst_20 : f32 to vector<1x64xf32>
    %45 = arith.mulf %40, %44 : vector<1x64xf32>
    %cst_21 = arith.constant 1.000000e-01 : f32
    %46 = vector.broadcast %cst_21 : f32 to vector<1x64xf32>
    %47 = arith.mulf %43, %46 : vector<1x64xf32>
    %48 = arith.mulf %45, %45 : vector<1x64xf32>
    %49 = arith.subf %47, %48 : vector<1x64xf32>
    %cst_22 = arith.constant 0.000000e+00 : f32
    %50 = vector.broadcast %cst_22 : f32 to vector<1x64xf32>
    %51 = arith.maximumf %49, %50 : vector<1x64xf32>
    %c0_23 = arith.constant 0 : index
    %c0_24 = arith.constant 0 : index
    %52 = vector.load %arg5[%c0_23, %c0_24] : memref<1x64xf32, #tpu.memory_space<vmem>>, vector<1x64xf32>
    %cst_25 = arith.constant 9.99999974E-6 : f32
    %53 = vector.broadcast %cst_25 : f32 to vector<1x64xf32>
    %54 = arith.addf %51, %53 : vector<1x64xf32>
    %55 = math.rsqrt %54 : vector<1x64xf32>
    %56 = arith.mulf %52, %55 : vector<1x64xf32>
    %c0_26 = arith.constant 0 : index
    %c0_27 = arith.constant 0 : index
    %57 = vector.load %arg6[%c0_26, %c0_27] : memref<1x64xf32, #tpu.memory_space<vmem>>, vector<1x64xf32>
    %58 = arith.mulf %45, %56 : vector<1x64xf32>
    %59 = arith.subf %57, %58 : vector<1x64xf32>
    %60 = vector.broadcast %56 : vector<1x64xf32> to vector<16x64xf32>
    %61 = arith.mulf %38, %60 : vector<16x64xf32>
    %62 = vector.broadcast %59 : vector<1x64xf32> to vector<16x64xf32>
    %63 = arith.addf %61, %62 : vector<16x64xf32>
    %cst_28 = arith.constant 0.000000e+00 : f32
    %64 = vector.broadcast %cst_28 : f32 to vector<16x64xf32>
    %65 = arith.maximumf %63, %64 : vector<16x64xf32>
    %c0_29 = arith.constant 0 : index
    %c0_30 = arith.constant 0 : index
    %66 = vector.load %arg7[%c0_29, %c0_30] : memref<64x128xf32, #tpu.memory_space<vmem>>, vector<64x128xf32>
    %cst_31 = arith.constant dense<0.000000e+00> : vector<16x128xf32>
    %67 = tpu.matmul %65, %66, %cst_31 {dimension_numbers = #tpu.dot_dimension_numbers<[1], [0], [0], [1], [0, 0, 1, 1], [], []>} : vector<16x64xf32>, vector<64x128xf32>, vector<16x128xf32> -> vector<16x128xf32>
    %c0_32 = arith.constant 0 : index
    %c0_33 = arith.constant 0 : index
    %68 = vector.load %arg8[%c0_32, %c0_33] : memref<1x128xf32, #tpu.memory_space<vmem>>, vector<1x128xf32>
    %69 = vector.broadcast %68 : vector<1x128xf32> to vector<16x128xf32>
    %70 = arith.addf %67, %69 : vector<16x128xf32>
    %c0_34 = arith.constant 0 : index
    %c0_35 = arith.constant 0 : index
    %71 = vector.load %arg9[%c0_34, %c0_35] : memref<16x128xf32, #tpu.memory_space<vmem>>, vector<16x128xf32>
    tpu.vector_store %arg9[%c0_34, %c0_35], %70 {strides = array<i32>} : memref<16x128xf32, #tpu.memory_space<vmem>>, vector<16x128xf32>,
    return
  }
}

</mosaic_0001>

<llo_original>
// kernel: tpu_custom_call.1
$region0: #{tpu_custom_call.1}
  #allocation0 [shape = 'u32[]', space=smem, size = 0x4, offset = 0x4, fixed_abs, tag = 'smem constant byte address 0x4 - core index']
  #allocation1 [shape = 'u32[72,128]{1,0:T(1,128)}', space=vmem, size = 0x9000, scoped, tag = 'internal scratch']
  %s0 = inlined_call_operand.vmem [shape: bf16[16,128], index: 0, kind: input, shape index: {}]
  %s1 = inlined_call_operand.vmem [shape: bf16[128,64], index: 1, kind: input, shape index: {}]
  %s2 = inlined_call_operand.vmem [shape: f32[1,64], index: 2, kind: input, shape index: {}]
  %s3 = inlined_call_operand.vmem [shape: f32[1,64], index: 3, kind: input, shape index: {}]
  %s4 = inlined_call_operand.vmem [shape: f32[64,64], index: 4, kind: input, shape index: {}]
  %s5 = inlined_call_operand.vmem [shape: f32[1,64], index: 5, kind: input, shape index: {}]
  %s6 = inlined_call_operand.vmem [shape: f32[1,64], index: 6, kind: input, shape index: {}]
  %s7 = inlined_call_operand.hbm [shape: f32[64,128], index: 7, kind: input, shape index: {}]
  %s8 = inlined_call_operand.vmem [shape: f32[1,128], index: 8, kind: input, shape index: {}]
  %s9 = inlined_call_operand.hbm [shape: f32[16,128], index: 9, kind: output, shape index: {}]
  %s10 = sld [smem:[#allocation0]]
  $region50: #{tpu_custom_call.1} parent=0
    _
  %s12 = ssub.s32 1, %s10
  %s13 = scalar_select 0, %s12, %s10
  $region1: #{tpu_custom_call.1} parent=0
    #allocation2 [shape = 'u8[32768]{0}', space=vmem, size = 0x8000, scoped, tag = 'input window, operand 7, single buffered']
    #allocation3 [shape = 's32[1]{0}', space=sflag, size = 0x4, scoped, tag = 'scoped memory for tpu_custom_call.1']
    #allocation4 [shape = 's32[1]{0}', space=sflag, size = 0x4, scoped, tag = 'scoped memory for tpu_custom_call.1']
    #allocation5 [shape = 'u8[8192]{0}', space=vmem, size = 0x2000, scoped, tag = 'output window, operand 0, single buffered']
    %14 = vsyncpa [#allocation3], 0
    %15 = vsyncpa [#allocation4], 0
    // Predicated region
    $region2: #{tpu_custom_call.1} parent=1 // pred_check
      _
    $region3: #{tpu_custom_call.1} parent=1 // pred_check_branch
      %17 = sbr.rel (0) target = $region5
    $region4: #{tpu_custom_call.1} parent=1 // pred_region
      _
    $region5: #{tpu_custom_call.1} parent=1 // pred_fallthru
      _
    // Predicated region
    $region6: #{tpu_custom_call.1} parent=1 // pred_check
      _
    $region7: #{tpu_custom_call.1} parent=1 // pred_check_branch
      %19 = sbr.rel (0) target = $region9
    $region8: #{tpu_custom_call.1} parent=1 // pred_region
      _
    $region9: #{tpu_custom_call.1} parent=1 // pred_fallthru
      _
    // Predicated region
    $region10: #{tpu_custom_call.1} parent=1 // pred_check
      _
    $region11: #{tpu_custom_call.1} parent=1 // pred_check_branch
      %21 = sbr.rel (0) target = $region13
    $region12: #{tpu_custom_call.1} parent=1 // pred_region
      _
    $region13: #{tpu_custom_call.1} parent=1 // pred_fallthru
      _
    // Predicated region
    $region14: #{tpu_custom_call.1} parent=1 // pred_check
      _
    $region15: #{tpu_custom_call.1} parent=1 // pred_check_branch
      %23 = sbr.rel (0) target = $region17
    $region16: #{tpu_custom_call.1} parent=1 // pred_region
      _
    $region17: #{tpu_custom_call.1} parent=1 // pred_fallthru
      _
    // Predicated region
    $region18: #{tpu_custom_call.1} parent=1 // pred_check
      _
    $region19: #{tpu_custom_call.1} parent=1 // pred_check_branch
      %25 = sbr.rel (0) target = $region21
    $region20: #{tpu_custom_call.1} parent=1 // pred_region
      _
    $region21: #{tpu_custom_call.1} parent=1 // pred_fallthru
      _
    // Predicated region
    $region22: #{tpu_custom_call.1} parent=1 // pred_check
      _
    $region23: #{tpu_custom_call.1} parent=1 // pred_check_branch
      %27 = sbr.rel (0) target = $region25
    $region24: #{tpu_custom_call.1} parent=1 // pred_region
      _
    $region25: #{tpu_custom_call.1} parent=1 // pred_fallthru
      _
    // Predicated region
    $region26: #{tpu_custom_call.1} parent=1 // pred_check
      _
    $region27: #{tpu_custom_call.1} parent=1 // pred_check_branch
      %29 = sbr.rel (0) target = $region29
    $region28: #{tpu_custom_call.1} parent=1 // pred_region
      _
    $region29: #{tpu_custom_call.1} parent=1 // pred_fallthru
      _
    // Predicated region
    $region30: #{tpu_custom_call.1} parent=1 // pred_check
      _
    $region31: #{tpu_custom_call.1} parent=1 // pred_check_branch
      %31 = sbr.rel (0) target = $region33
    $region32: #{tpu_custom_call.1} parent=1 // pred_region
      %33 = vsyncadd [#allocation3], 0
      %s34 = sshll.u32 %s7, 4
      %s35 = int_to_ptr.hbm [resolvable:$true] %s34
      %s36 = sshll.u32 [#allocation2], 4
      %s37 = int_to_ptr.vmem [resolvable:$true] %s36
      %42 = dma.hbm_to_vmem [thread:$0]  %s35, 1024, %s37, [#allocation3], 128, 128, 8
    $region33: #{tpu_custom_call.1} parent=1 // pred_fallthru
      _
    // Predicated region
    $region34: #{tpu_custom_call.1} parent=1 // pred_check
      _
    $region35: #{tpu_custom_call.1} parent=1 // pred_check_branch
      %44 = sbr.rel (0) target = $region37
    $region36: #{tpu_custom_call.1} parent=1 // pred_region
      _
    $region37: #{tpu_custom_call.1} parent=1 // pred_fallthru
      _
    // Predicated region
    $region38: #{tpu_custom_call.1} parent=1 // pred_check
      _
    $region39: #{tpu_custom_call.1} parent=1 // pred_check_branch
      %46 = sbr.rel (0) target = $region41
    $region40: #{tpu_custom_call.1} parent=1 // pred_region
      %48 = dma.done [#allocation3], 1024
    $region41: #{tpu_custom_call.1} parent=1 // pred_fallthru
      _
    %v49 = vld [vmem:[%s0] sm:$0xf]
    %v50 = vld [vmem:[%s0 + $0x4] sm:$0xf]
    %v51 = vld [vmem:[%s1] sm:$0xf]
    %v52 = vld [vmem:[%s1 + $0x4] sm:$0xf]
    %v53 = vld [vmem:[%s1 + $0x8] sm:$0xf]
    %v54 = vld [vmem:[%s1 + $0xc] sm:$0xf]
    %v55 = vld [vmem:[%s1 + $0x10] sm:$0xf]
    %v56 = vld [vmem:[%s1 + $0x14] sm:$0xf]
    %v57 = vld [vmem:[%s1 + $0x18] sm:$0xf]
    %v58 = vld [vmem:[%s1 + $0x1c] sm:$0xf]
    %v59 = vld [vmem:[%s1 + $0x20] sm:$0xf]
    %v60 = vld [vmem:[%s1 + $0x24] sm:$0xf]
    %v61 = vld [vmem:[%s1 + $0x28] sm:$0xf]
    %v62 = vld [vmem:[%s1 + $0x2c] sm:$0xf]
    %v63 = vld [vmem:[%s1 + $0x30] sm:$0xf]
    %v64 = vld [vmem:[%s1 + $0x34] sm:$0xf]
    %v65 = vld [vmem:[%s1 + $0x38] sm:$0xf]
    %v66 = vld [vmem:[%s1 + $0x3c] sm:$0xf]
    %v69 = vunpack.c.l.b16 %v49
    %v70 = vunpack.c.l.b16 %v50
    %v71 = vpack.c.b16 %v70, %v69
    %v89 = vunpack.c.l.b16 %v51
    %v90 = vunpack.c.l.b16 %v52
    %v91 = vunpack.c.l.b16 %v53
    %v92 = vunpack.c.l.b16 %v54
    %v93 = vunpack.c.l.b16 %v55
    %v94 = vunpack.c.l.b16 %v56
    %v95 = vunpack.c.l.b16 %v57
    %v96 = vunpack.c.l.b16 %v58
    %v97 = vunpack.c.l.b16 %v59
    %v98 = vunpack.c.l.b16 %v60
    %v99 = vunpack.c.l.b16 %v61
    %v100 = vunpack.c.l.b16 %v62
    %v101 = vunpack.c.l.b16 %v63
    %v102 = vunpack.c.l.b16 %v64
    %v103 = vunpack.c.l.b16 %v65
    %v104 = vunpack.c.l.b16 %v66
    %v105 = vpack.c.b16 %v90, %v89
    %v106 = vpack.c.b16 %v92, %v91
    %v107 = vpack.c.b16 %v94, %v93
    %v108 = vpack.c.b16 %v96, %v95
    %v109 = vpack.c.b16 %v98, %v97
    %v110 = vpack.c.b16 %v100, %v99
    %v111 = vpack.c.b16 %v102, %v101
    %v112 = vpack.c.b16 %v104, %v103
    %121 = vmatpush.bf16.msra.mxu0 %v112
    %122 = vmatpush.bf16.msra.mxu0 %v111
    %123 = vmatpush.bf16.msra.mxu0 %v110
    %124 = vmatpush.bf16.msra.mxu0 %v109
    %125 = vmatpush.bf16.msra.mxu0 %v108
    %126 = vmatpush.bf16.msra.mxu0 %v107
    %127 = vmatpush.bf16.msra.mxu0 %v106
    %128 = vmatpush.bf16.msra.mxu0 %v105
    %129 = vmatmul.bf16.gmra.mxu0 %v71
    %v130 = vpop.f32.mrf.mxu0
    %v131 = vadd.f32 0.0, %v130
    %v132 = vpop.f32.mrf.mxu0
    %v133 = vadd.f32 0.0, %v132
    %134 = vdwg.mxu0
    %vm135 = vcmask 523264
    %v136 = vsel %vm135, %v131, 0.0
    %v137 = vsel %vm135, %v133, 0.0
    %v138 = vadd.f32 %v136, %v137
    %v139 = vrot.slane %v138, 4
    %v140 = vadd.f32 %v138, %v139
    %v141 = vrot.slane %v140, 2
    %v142 = vadd.f32 %v140, %v141
    %v143 = vrot.slane %v142, 1
    %v144 = vadd.f32 %v142, %v143
    %v145 = vmul.f32 %v131, %v131
    %v146 = vmul.f32 %v133, %v133
    %v147 = vsel %vm135, %v145, 0.0
    %v148 = vsel %vm135, %v146, 0.0
    %v149 = vadd.f32 %v147, %v148
    %v150 = vrot.slane %v149, 4
    %v151 = vadd.f32 %v149, %v150
    %v152 = vrot.slane %v151, 2
    %v153 = vadd.f32 %v151, %v152
    %v154 = vrot.slane %v153, 1
    %v155 = vadd.f32 %v153, %v154
    %v156 = vmul.f32 %v144, 0.1
    %v157 = vmul.f32 %v155, 0.1
    %v158 = vmul.f32 %v156, %v156
    %v159 = vsub.f32 %v157, %v158
    %v160 = vmax.f32 %v159, 0.0
    %v161 = vld [vmem:[%s2] sm:$0x1]
    %v162 = vadd.f32 %v160, 1e-05
    %v163 = vrsqrt.pop %v162
    %v164 = vmul.f32 %v163, %v162
    %v165 = vmul.f32 %v164, %v163
    %v166 = vmul.f32 0.5, %v165
    %v167 = vsub.f32 1.5, %v166
    %v168 = vmul.f32 %v163, %v167
    %vm169 = vweird.f32 %v162
    %vm170 = vweird.f32 %v163
    %vm171 = vmor %vm169, %vm170
    %v172 = vsel %vm171, %v163, %v168
    %v173 = vmul.f32 %v161, %v172
    %v174 = vld [vmem:[%s3] sm:$0x1]
    %v175 = vmul.f32 %v156, %v173
    %v176 = vsub.f32 %v174, %v175
    %v178 = vperm.slane %v173, 0
    %v180 = vmul.f32 %v131, %v178
    %v181 = vmul.f32 %v133, %v178
    %v183 = vperm.slane %v176, 0
    %v185 = vadd.f32 %v180, %v183
    %v186 = vadd.f32 %v181, %v183
    %v187 = vmax.f32 %v185, 0.0
    %v188 = vmax.f32 %v186, 0.0
    %v189 = vlaneseq
    %v190 = vshrl.u32 %v189, 7
    %v191 = vadd.s32 %v190, 8
    %vm192 = vcmp.lt.s32.totalorder %v190, 10
    %vm193 = vcmp.lt.s32.totalorder %v191, 10
    %v194 = vsel %vm192, 1, 0
    %v195 = vsel %vm193, 1, 0
    %vm196 = vcmp.eq.s32.totalorder %v194, 1
    %vm197 = vcmp.eq.s32.totalorder %v195, 1
    %v198 = vsel %vm196, %v187, 0.0
    %v199 = vsel %vm197, %v188, 0.0
    %v200 = vld [vmem:[%s4] sm:$0xff]
    %v201 = vld [vmem:[%s4 + $0x8] sm:$0xff]
    %v202 = vld [vmem:[%s4 + $0x10] sm:$0xff]
    %v203 = vld [vmem:[%s4 + $0x18] sm:$0xff]
    %v204 = vld [vmem:[%s4 + $0x20] sm:$0xff]
    %v205 = vld [vmem:[%s4 + $0x28] sm:$0xff]
    %v206 = vld [vmem:[%s4 + $0x30] sm:$0xff]
    %v207 = vld [vmem:[%s4 + $0x38] sm:$0xff]
    %v209 = vsel %vm135, %v198, 0
    %v212 = vsel %vm135, %v199, 0
    %214 = vmatpush.msra.mxu0 0.0
    %215 = vmatpush.msra.mxu0 0.0
    %216 = vmatpush.msra.mxu0 0.0
    %217 = vmatpush.msra.mxu0 0.0
    %218 = vmatpush.msra.mxu0 0.0
    %219 = vmatpush.msra.mxu0 0.0
    %220 = vmatpush.msra.mxu0 0.0
    %221 = vmatpush.msra.mxu0 0.0
    %222 = vmatpush.msra.mxu0 %v207
    %223 = vmatpush.msra.mxu0 %v206
    %224 = vmatpush.msra.mxu0 %v205
    %225 = vmatpush.msra.mxu0 %v204
    %226 = vmatpush.msra.mxu0 %v203
    %227 = vmatpush.msra.mxu0 %v202
    %228 = vmatpush.msra.mxu0 %v201
    %229 = vmatpush.msra.mxu0 %v200
    %230 = vmatmul.f32.gmra.mxu0 %v209
    %v231 = vpop.f32.mrf.mxu0
    %v232 = vadd.f32 0.0, %v231
    %233 = vmatmul.f32.gmra.mxu0 %v212
    %v234 = vpop.f32.mrf.mxu0
    %v235 = vadd.f32 0.0, %v234
    %236 = vdwg.mxu0
    %v237 = vsel %vm135, %v232, 0.0
    %v238 = vsel %vm135, %v235, 0.0
    %v239 = vadd.f32 %v237, %v238
    %v240 = vrot.slane %v239, 4
    %v241 = vadd.f32 %v239, %v240
    %v242 = vrot.slane %v241, 2
    %v243 = vadd.f32 %v241, %v242
    %v244 = vrot.slane %v243, 1
    %v245 = vadd.f32 %v243, %v244
    %v246 = vmul.f32 %v232, %v232
    %v247 = vmul.f32 %v235, %v235
    %v248 = vsel %vm135, %v246, 0.0
    %v249 = vsel %vm135, %v247, 0.0
    %v250 = vadd.f32 %v248, %v249
    %v251 = vrot.slane %v250, 4
    %v252 = vadd.f32 %v250, %v251
    %v253 = vrot.slane %v252, 2
    %v254 = vadd.f32 %v252, %v253
    %v255 = vrot.slane %v254, 1
    %v256 = vadd.f32 %v254, %v255
    %v257 = vmul.f32 %v245, 0.1
    %v258 = vmul.f32 %v256, 0.1
    %v259 = vmul.f32 %v257, %v257
    %v260 = vsub.f32 %v258, %v259
    %v261 = vmax.f32 %v260, 0.0
    %v262 = vld [vmem:[%s5] sm:$0x1]
    %v263 = vadd.f32 %v261, 1e-05
    %v264 = vrsqrt.pop %v263
    %v265 = vmul.f32 %v264, %v263
    %v266 = vmul.f32 %v265, %v264
    %v267 = vmul.f32 0.5, %v266
    %v268 = vsub.f32 1.5, %v267
    %v269 = vmul.f32 %v264, %v268
    %vm270 = vweird.f32 %v263
    %vm271 = vweird.f32 %v264
    %vm272 = vmor %vm270, %vm271
    %v273 = vsel %vm272, %v264, %v269
    %v274 = vmul.f32 %v262, %v273
    %v275 = vld [vmem:[%s6] sm:$0x1]
    %v276 = vmul.f32 %v257, %v274
    %v277 = vsub.f32 %v275, %v276
    %v279 = vperm.slane %v274, 0
    %v281 = vmul.f32 %v232, %v279
    %v282 = vmul.f32 %v235, %v279
    %v284 = vperm.slane %v277, 0
    %v286 = vadd.f32 %v281, %v284
    %v287 = vadd.f32 %v282, %v284
    %v288 = vmax.f32 %v286, 0.0
    %v289 = vmax.f32 %v287, 0.0
    %v290 = vld [vmem:[#allocation2] sm:$0xff]
    %v291 = vld [vmem:[#allocation2 + $0x8] sm:$0xff]
    %v292 = vld [vmem:[#allocation2 + $0x10] sm:$0xff]
    %v293 = vld [vmem:[#allocation2 + $0x18] sm:$0xff]
    %v294 = vld [vmem:[#allocation2 + $0x20] sm:$0xff]
    %v295 = vld [vmem:[#allocation2 + $0x28] sm:$0xff]
    %v296 = vld [vmem:[#allocation2 + $0x30] sm:$0xff]
    %v297 = vld [vmem:[#allocation2 + $0x38] sm:$0xff]
    %v298 = vld [vmem:[%s8] sm:$0x1]
    %v300 = vperm.slane %v298, 0
    %v303 = vsel %vm135, %v288, 0
    %v306 = vsel %vm135, %v289, 0
    %308 = vmatpush.msra.mxu0 0.0
    %309 = vmatpush.msra.mxu0 0.0
    %310 = vmatpush.msra.mxu0 0.0
    %311 = vmatpush.msra.mxu0 0.0
    %312 = vmatpush.msra.mxu0 0.0
    %313 = vmatpush.msra.mxu0 0.0
    %314 = vmatpush.msra.mxu0 0.0
    %315 = vmatpush.msra.mxu0 0.0
    %316 = vmatpush.msra.mxu0 %v297
    %317 = vmatpush.msra.mxu0 %v296
    %318 = vmatpush.msra.mxu0 %v295
    %319 = vmatpush.msra.mxu0 %v294
    %320 = vmatpush.msra.mxu0 %v293
    %321 = vmatpush.msra.mxu0 %v292
    %322 = vmatpush.msra.mxu0 %v291
    %323 = vmatpush.msra.mxu0 %v290
    %324 = vmatmul.f32.gmra.mxu0 %v303
    %v325 = vpop.f32.mrf.mxu0
    %v326 = vadd.f32 %v300, %v325
    %327 = vmatmul.f32.gmra.mxu0 %v306
    %v328 = vpop.f32.mrf.mxu0
    %v329 = vadd.f32 %v300, %v328
    %330 = vdwg.mxu0
    %331 = vst [vmem:[#allocation5] sm:$0xff] %v326
    %332 = vst [vmem:[#allocation5 + $0x8] sm:$0xff] %v329
    // Predicated region
    $region42: #{tpu_custom_call.1} parent=1 // pred_check
      _
    $region43: #{tpu_custom_call.1} parent=1 // pred_check_branch
      %334 = sbr.rel (0) target = $region45
    $region44: #{tpu_custom_call.1} parent=1 // pred_region
      %336 = vsyncadd [#allocation4], 0
      %s337 = sshll.u32 [#allocation5], 4
      %s338 = int_to_ptr.vmem [resolvable:$true] %s337
      %s339 = sshll.u32 %s9, 4
      %s340 = int_to_ptr.hbm [resolvable:$true] %s339
      %345 = dma.vmem_to_hbm [thread:$0]  %s338, 256, %s340, [#allocation4], 128, 128, 8
    $region45: #{tpu_custom_call.1} parent=1 // pred_fallthru
      _
    // Predicated region
    $region46: #{tpu_custom_call.1} parent=1 // pred_check
      _
    $region47: #{tpu_custom_call.1} parent=1 // pred_check_branch
      %347 = sbr.rel (0) target = $region49
    $region48: #{tpu_custom_call.1} parent=1 // pred_region
      %349 = dma.done [#allocation4], 256
    $region49: #{tpu_custom_call.1} parent=1 // pred_fallthru
      _
    %350 = vsyncpa [#allocation3], 1
    %351 = vsyncpa [#allocation4], 1

</llo_original>
